<compile_context>
chip_gen: v5e
topology: v5e:2x2
jax: 0.10.0
libtpu: 0.0.40
codegen_flags: <defaults>
</compile_context>

<pallas_src>
import numpy as np
import jax
import jax.numpy as jnp
from jax.experimental import pallas as pl
from jax.experimental.pallas import tpu as pltpu


def _pick_batch_tile(B, C):
    """Batch tile Bt (a divisor of B).

    Largest divisor of B with Bt*C <= 512 rows per block: for small B this gives Bt = B and a
    SINGLE grid step (the dominant win at this problem size).  Only when that single step would
    already carry >= 2*256 MXU rows do we split it in two so both v7x TensorCores get a
    full-width step along the 'parallel' grid axis.
    """
    cap = max(C, 512)
    bt = 1
    for cand in range(1, B + 1):
        if B % cand == 0 and cand * C <= cap:
            bt = cand
    if B // bt == 1 and bt % 2 == 0 and (bt // 2) * C >= 256:
        bt //= 2
    # Keep the (8, 128) block-shape constraint safe when there is more than one grid step.
    if B // bt > 1 and (bt * C) % 8 != 0:
        bt = B
    return bt


def rfft_irfft_forward(x, high_freq_nb=3):
    """Pallas implementation of RFFT_IRFFT.forward.  x: (B, C, H, W) f32 -> (B, 3C, H, W) f32."""
    B, C, H, W = x.shape
    assert 0 <= high_freq_nb < H // 2
    # PyTorch derives both frequency bounds from x.shape[2] (== H); we match that exactly.
    lo, hi = high_freq_nb, H - high_freq_nb
    HW = H * W
    Bt = _pick_batch_tile(B, C)
    nb = B // Bt
    R = Bt * C                      # rows per grid step == MXU M dimension

    # ---------------- host-side (trace-time) constants, scale + mask folded in ----------------
    h = np.arange(H)
    w = np.arange(W)
    # M[(h,w),(k1,k2)] = cos(2*pi*(k1*h/H + k2*w/W)) / (H*W)  == Re of fft2(., norm='forward')
    ang = 2.0 * np.pi * (np.outer(h, h)[:, None, :, None] / H +
                         np.outer(w, w)[None, :, None, :] / W)        # (h, w, k1, k2)
    M = np.cos(ang) / float(HW)
    mk1 = ((np.arange(H) >= lo) & (np.arange(H) < hi)).astype(np.float64)
    mk2 = ((np.arange(W) >= lo) & (np.arange(W) < hi)).astype(np.float64)
    mask = np.outer(mk1, mk2)                                         # (k1, k2) high-freq block
    M_high = M * mask[None, None, :, :]
    M_low = M - M_high
    # Fused spatial matrix: rows = flattened (h, w), cols = [low (k1,k2) | high (k1,k2)].
    MLH = np.concatenate([M_low.reshape(HW, HW), M_high.reshape(HW, HW)], axis=1)  # (HW, 2*HW)
    MLH = jnp.asarray(MLH, jnp.bfloat16)          # bf16 weights, f32 accumulation in the kernel

    # Channel-axis unnormalized inverse-DFT real part; baked into the kernel as Python floats.
    KC = np.cos(2.0 * np.pi * np.outer(np.arange(C), np.arange(C)) / C)            # (C, C)

    # -------- wrapper-side layout (free metadata + tiny XLA transpose, no in-kernel reshape) --
    # Rows ordered (tile, channel, batch-in-tile): each grid step's block is contiguous, and
    # per-channel row groups inside a block are contiguous static slices.
    x2 = x.reshape(nb, Bt, C, HW).transpose(0, 2, 1, 3).reshape(nb * R, HW)         # f32

    def kernel(x_ref, mlh_ref, o_ref):
        xb = x_ref[...]                                   # (R, HW) f32, rows = (channel, batch)
        o_ref[0, :, :] = xb                               # passthrough branch: dense aligned store
        # ---- channel cosine mix on the VPU (C*C broadcast-FMAs, coefficients baked in) ----
        xc = [xb[c * Bt:(c + 1) * Bt, :] for c in range(C)]          # (Bt, HW) per-channel slabs
        zparts = []
        for d in range(C):
            acc = xc[0] * float(KC[d, 0])
            for c in range(1, C):
                acc = acc + xc[c] * float(KC[d, c])
            zparts.append(acc)                            # (Bt, HW) f32
        z = jnp.concatenate(zparts, axis=0).astype(jnp.bfloat16)     # (R, HW), rows = (d, batch)
        # ---- single big MXU matmul: both branches at once, f32 accumulation ----
        lh = jnp.dot(z, mlh_ref[...], preferred_element_type=jnp.float32)           # (R, 2*HW)
        o_ref[1, :, :] = lh[:, :HW]                       # low-frequency branch (dense store)
        o_ref[2, :, :] = lh[:, HW:]                       # high-frequency branch (dense store)

    out = pl.pallas_call(
        kernel,
        out_shape=jax.ShapeDtypeStruct((3, nb * R, HW), jnp.float32),
        grid_spec=pltpu.PrefetchScalarGridSpec(
            num_scalar_prefetch=0,
            grid=(nb,),                                                # 1 step for the test shape
            in_specs=[
                pl.BlockSpec((R, HW), lambda t: (t, 0)),               # x rows for this tile
                pl.BlockSpec((HW, 2 * HW), lambda t: (0, 0)),          # fused [M_low | M_high]
            ],
            out_specs=pl.BlockSpec((3, R, HW), lambda t: (0, t, 0)),   # branch-major output slab
        ),
        compiler_params=pltpu.CompilerParams(
            dimension_semantics=("parallel",),
            vmem_limit_bytes=32 * 1024 * 1024,    # ample headroom; actual footprint ~1 MiB
        ),
    )(x2, MLH)

    # Un-tangle (branch, (tile, chan, batch-in-tile)) rows back to (B, 3C, H, W).  Pure layout
    # plumbing on a tiny tensor; keeps every in-kernel store lane-dense and sublane-aligned.
    out = (out.reshape(3, nb, C, Bt, HW)
              .transpose(1, 3, 0, 2, 4)
              .reshape(B, 3 * C, H, W))
    return out


def reference_forward(x, high_freq_nb=3):
    """Pure-JAX reference mirroring the PyTorch semantics (incl. complex->real casts)."""
    B, C, H, W = x.shape
    lo, hi = high_freq_nb, H - high_freq_nb
    f = jnp.fft.fft2(x, norm="forward")
    re_f = jnp.real(f)
    k1 = (jnp.arange(H) >= lo) & (jnp.arange(H) < hi)
    k2 = (jnp.arange(W) >= lo) & (jnp.arange(W) < hi)
    mask = (k1[:, None] & k2[None, :]).astype(jnp.float32)
    high = re_f * mask
    low = re_f - high
    out_low = jnp.real(jnp.fft.ifft(low, axis=1, norm="forward")).astype(jnp.float32)
    out_high = jnp.real(jnp.fft.ifft(high, axis=1, norm="forward")).astype(jnp.float32)
    return jnp.concatenate([x, out_low, out_high], axis=1)


if __name__ == "__main__":
    B, C, H, W = 2, 4, 16, 16
    key = jax.random.PRNGKey(0)
    x = jax.random.normal(key, (B, C, H, W), dtype=jnp.float32)

    out = rfft_irfft_forward(x, high_freq_nb=3)
    out = jax.block_until_ready(out)

    assert out.shape == (B, 3 * C, H, W), out.shape
    ref = reference_forward(x, high_freq_nb=3)
    max_err = float(jnp.max(jnp.abs(out - ref)))
    assert max_err < 2e-2, f"max abs error too large: {max_err}"

    print("KERNEL_OK")
</pallas_src>

<mosaic_0001>
module attributes {stable_mosaic.version = 11 : i64} {
  func.func @kernel(%arg0: i32, %arg1: memref<8x256xf32, #tpu.memory_space<vmem>>, %arg2: memref<256x512xbf16, #tpu.memory_space<vmem>>, %arg3: memref<3x8x256xf32, #tpu.memory_space<vmem>>) attributes {dimension_semantics = [#tpu.dimension_semantics<parallel>], iteration_bounds = array<i64: 1>, scalar_prefetch = 0 : i64, scratch_operands = 0 : i64, tpu.core_type = #tpu.core_type<tc>, window_params = [{transform_indices = @transform_0, window_bounds = array<i64: 8, 256>}, {pipeline_mode = #tpu.pipeline_mode<synchronous>, transform_indices = @transform_1, window_bounds = array<i64: 256, 512>}, {transform_indices = @transform_2, window_bounds = array<i64: 3, 8, 256>}]} {
    %c0 = arith.constant 0 : index
    %c0_0 = arith.constant 0 : index
    %0 = vector.load %arg1[%c0, %c0_0] : memref<8x256xf32, #tpu.memory_space<vmem>>, vector<8x256xf32>
    %c0_1 = arith.constant 0 : index
    %c0_2 = arith.constant 0 : index
    %c0_3 = arith.constant 0 : index
    %1 = vector.load %arg3[%c0_1, %c0_2, %c0_3] : memref<3x8x256xf32, #tpu.memory_space<vmem>>, vector<1x8x256xf32>
    %2 = vector.shape_cast %1 : vector<1x8x256xf32> to vector<8x256xf32>
    %3 = vector.shape_cast %0 : vector<8x256xf32> to vector<1x8x256xf32>
    tpu.vector_store %arg3[%c0_1, %c0_2, %c0_3], %3 {strides = array<i32>} : memref<3x8x256xf32, #tpu.memory_space<vmem>>, vector<1x8x256xf32>,
    %4 = vector.extract_strided_slice %0 {offsets = [0, 0], sizes = [2, 256], strides = [1, 1]} : vector<8x256xf32> to vector<2x256xf32>
    %5 = vector.extract_strided_slice %0 {offsets = [2, 0], sizes = [2, 256], strides = [1, 1]} : vector<8x256xf32> to vector<2x256xf32>
    %6 = vector.extract_strided_slice %0 {offsets = [4, 0], sizes = [2, 256], strides = [1, 1]} : vector<8x256xf32> to vector<2x256xf32>
    %7 = vector.extract_strided_slice %0 {offsets = [6, 0], sizes = [2, 256], strides = [1, 1]} : vector<8x256xf32> to vector<2x256xf32>
    %cst = arith.constant 1.000000e+00 : f32
    %8 = vector.broadcast %cst : f32 to vector<2x256xf32>
    %9 = arith.mulf %4, %8 : vector<2x256xf32>
    %cst_4 = arith.constant 1.000000e+00 : f32
    %10 = vector.broadcast %cst_4 : f32 to vector<2x256xf32>
    %11 = arith.mulf %5, %10 : vector<2x256xf32>
    %12 = arith.addf %9, %11 : vector<2x256xf32>
    %cst_5 = arith.constant 1.000000e+00 : f32
    %13 = vector.broadcast %cst_5 : f32 to vector<2x256xf32>
    %14 = arith.mulf %6, %13 : vector<2x256xf32>
    %15 = arith.addf %12, %14 : vector<2x256xf32>
    %cst_6 = arith.constant 1.000000e+00 : f32
    %16 = vector.broadcast %cst_6 : f32 to vector<2x256xf32>
    %17 = arith.mulf %7, %16 : vector<2x256xf32>
    %18 = arith.addf %15, %17 : vector<2x256xf32>
    %cst_7 = arith.constant 1.000000e+00 : f32
    %19 = vector.broadcast %cst_7 : f32 to vector<2x256xf32>
    %20 = arith.mulf %4, %19 : vector<2x256xf32>
    %cst_8 = arith.constant 6.12323426E-17 : f32
    %21 = vector.broadcast %cst_8 : f32 to vector<2x256xf32>
    %22 = arith.mulf %5, %21 : vector<2x256xf32>
    %23 = arith.addf %20, %22 : vector<2x256xf32>
    %cst_9 = arith.constant -1.000000e+00 : f32
    %24 = vector.broadcast %cst_9 : f32 to vector<2x256xf32>
    %25 = arith.mulf %6, %24 : vector<2x256xf32>
    %26 = arith.addf %23, %25 : vector<2x256xf32>
    %cst_10 = arith.constant -1.83697015E-16 : f32
    %27 = vector.broadcast %cst_10 : f32 to vector<2x256xf32>
    %28 = arith.mulf %7, %27 : vector<2x256xf32>
    %29 = arith.addf %26, %28 : vector<2x256xf32>
    %cst_11 = arith.constant 1.000000e+00 : f32
    %30 = vector.broadcast %cst_11 : f32 to vector<2x256xf32>
    %31 = arith.mulf %4, %30 : vector<2x256xf32>
    %cst_12 = arith.constant -1.000000e+00 : f32
    %32 = vector.broadcast %cst_12 : f32 to vector<2x256xf32>
    %33 = arith.mulf %5, %32 : vector<2x256xf32>
    %34 = arith.addf %31, %33 : vector<2x256xf32>
    %cst_13 = arith.constant 1.000000e+00 : f32
    %35 = vector.broadcast %cst_13 : f32 to vector<2x256xf32>
    %36 = arith.mulf %6, %35 : vector<2x256xf32>
    %37 = arith.addf %34, %36 : vector<2x256xf32>
    %cst_14 = arith.constant -1.000000e+00 : f32
    %38 = vector.broadcast %cst_14 : f32 to vector<2x256xf32>
    %39 = arith.mulf %7, %38 : vector<2x256xf32>
    %40 = arith.addf %37, %39 : vector<2x256xf32>
    %cst_15 = arith.constant 1.000000e+00 : f32
    %41 = vector.broadcast %cst_15 : f32 to vector<2x256xf32>
    %42 = arith.mulf %4, %41 : vector<2x256xf32>
    %cst_16 = arith.constant -1.83697015E-16 : f32
    %43 = vector.broadcast %cst_16 : f32 to vector<2x256xf32>
    %44 = arith.mulf %5, %43 : vector<2x256xf32>
    %45 = arith.addf %42, %44 : vector<2x256xf32>
    %cst_17 = arith.constant -1.000000e+00 : f32
    %46 = vector.broadcast %cst_17 : f32 to vector<2x256xf32>
    %47 = arith.mulf %6, %46 : vector<2x256xf32>
    %48 = arith.addf %45, %47 : vector<2x256xf32>
    %cst_18 = arith.constant 5.5109107E-16 : f32
    %49 = vector.broadcast %cst_18 : f32 to vector<2x256xf32>
    %50 = arith.mulf %7, %49 : vector<2x256xf32>
    %51 = arith.addf %48, %50 : vector<2x256xf32>
    %52 = tpu.concatenate %18, %29, %40, %51 in 0 : vector<2x256xf32>, vector<2x256xf32>, vector<2x256xf32>, vector<2x256xf32> -> vector<8x256xf32>
    %53 = arith.truncf %52 : vector<8x256xf32> to vector<8x256xbf16>
    %c0_19 = arith.constant 0 : index
    %c0_20 = arith.constant 0 : index
    %54 = vector.load %arg2[%c0_19, %c0_20] : memref<256x512xbf16, #tpu.memory_space<vmem>>, vector<256x512xbf16>
    %cst_21 = arith.constant dense<0.000000e+00> : vector<8x512xf32>
    %55 = tpu.matmul %53, %54, %cst_21 {dimension_numbers = #tpu.dot_dimension_numbers<[1], [0], [0], [1], [0, 0, 1, 1], [], []>} : vector<8x256xbf16>, vector<256x512xbf16>, vector<8x512xf32> -> vector<8x512xf32>
    %56 = vector.extract_strided_slice %55 {offsets = [0, 0], sizes = [8, 256], strides = [1, 1]} : vector<8x512xf32> to vector<8x256xf32>
    %c1 = arith.constant 1 : index
    %c0_22 = arith.constant 0 : index
    %c0_23 = arith.constant 0 : index
    %57 = vector.load %arg3[%c1, %c0_22, %c0_23] : memref<3x8x256xf32, #tpu.memory_space<vmem>>, vector<1x8x256xf32>
    %58 = vector.shape_cast %57 : vector<1x8x256xf32> to vector<8x256xf32>
    %59 = vector.shape_cast %56 : vector<8x256xf32> to vector<1x8x256xf32>
    tpu.vector_store %arg3[%c1, %c0_22, %c0_23], %59 {strides = array<i32>} : memref<3x8x256xf32, #tpu.memory_space<vmem>>, vector<1x8x256xf32>,
    %60 = vector.extract_strided_slice %55 {offsets = [0, 256], sizes = [8, 256], strides = [1, 1]} : vector<8x512xf32> to vector<8x256xf32>
    %c2 = arith.constant 2 : index
    %c0_24 = arith.constant 0 : index
    %c0_25 = arith.constant 0 : index
    %61 = vector.load %arg3[%c2, %c0_24, %c0_25] : memref<3x8x256xf32, #tpu.memory_space<vmem>>, vector<1x8x256xf32>
    %62 = vector.shape_cast %61 : vector<1x8x256xf32> to vector<8x256xf32>
    %63 = vector.shape_cast %60 : vector<8x256xf32> to vector<1x8x256xf32>
    tpu.vector_store %arg3[%c2, %c0_24, %c0_25], %63 {strides = array<i32>} : memref<3x8x256xf32, #tpu.memory_space<vmem>>, vector<1x8x256xf32>,
    return
  }
  func.func @transform_0(%arg0: i32) -> (i32, i32) {
    %c0_i32 = arith.constant 0 : i32
    %c0_i32_0 = arith.constant 0 : i32
    return %arg0, %c0_i32 : i32, i32
  }
  func.func @transform_1(%arg0: i32) -> (i32, i32) {
    %c0_i32 = arith.constant 0 : i32
    %c0_i32_0 = arith.constant 0 : i32
    %c0_i32_1 = arith.constant 0 : i32
    return %c0_i32, %c0_i32_0 : i32, i32
  }
  func.func @transform_2(%arg0: i32) -> (i32, i32, i32) {
    %c0_i32 = arith.constant 0 : i32
    %c0_i32_0 = arith.constant 0 : i32
    %c0_i32_1 = arith.constant 0 : i32
    return %c0_i32, %arg0, %c0_i32_0 : i32, i32, i32
  }
}

</mosaic_0001>

<llo_original>
// kernel: tpu_custom_call.1
$region0: #{tpu_custom_call.1}
  #allocation0 [shape = 'u32[]', space=smem, size = 0x4, offset = 0x4, fixed_abs, tag = 'smem constant byte address 0x4 - core index']
  #allocation1 [shape = 'u32[72,128]{1,0:T(1,128)}', space=vmem, size = 0x9000, scoped, tag = 'internal scratch']
  %s0 = inlined_call_operand.hbm [shape: f32[8,256], index: 0, kind: input, shape index: {}]
  %s1 = inlined_call_operand.hbm [shape: bf16[256,512], index: 1, kind: input, shape index: {}]
  %s2 = inlined_call_operand.hbm [shape: f32[3,8,256], index: 2, kind: output, shape index: {}]
  %s3 = sld [smem:[#allocation0]]
  $region26: #{tpu_custom_call.1} parent=0
    _
  %s5 = ssub.s32 1, %s3
  %s6 = scalar_select 0, %s5, %s3
  $region1: #{tpu_custom_call.1} parent=0
    #allocation2 [shape = 'u8[8192]{0}', space=vmem, size = 0x2000, scoped, tag = 'input window, operand 0, single buffered']
    #allocation3 [shape = 's32[1]{0}', space=sflag, size = 0x4, scoped, tag = 'scoped memory for tpu_custom_call.1']
    #allocation4 [shape = 's32[1]{0}', space=sflag, size = 0x4, scoped, tag = 'scoped memory for tpu_custom_call.1']
    #allocation5 [shape = 'u8[262144]{0}', space=vmem, size = 0x40000, scoped, tag = 'input window, operand 1, single buffered']
    #allocation6 [shape = 's32[1]{0}', space=sflag, size = 0x4, scoped, tag = 'scoped memory for tpu_custom_call.1']
    #allocation7 [shape = 'u8[24576]{0}', space=vmem, size = 0x6000, scoped, tag = 'output window, operand 0, single buffered']
    %7 = vsyncpa [#allocation3], 0
    %8 = vsyncpa [#allocation6], 0
    %9 = vsyncpa [#allocation4], 0
    // Predicated region
    $region2: #{tpu_custom_call.1} parent=1 // pred_check
      _
    $region3: #{tpu_custom_call.1} parent=1 // pred_check_branch
      %11 = sbr.rel (0) target = $region5
    $region4: #{tpu_custom_call.1} parent=1 // pred_region
      %13 = vsyncadd [#allocation3], 0
      %s15 = sshll.u32 %s0, 4
      %s16 = int_to_ptr.hbm [resolvable:$true] %s15
      %s17 = sshll.u32 [#allocation2], 4
      %s18 = int_to_ptr.vmem [resolvable:$true] %s17
      %20 = dma.hbm_to_vmem [thread:$0]  %s16, 256, %s18, [#allocation3]
    $region5: #{tpu_custom_call.1} parent=1 // pred_fallthru
      _
    // Predicated region
    $region6: #{tpu_custom_call.1} parent=1 // pred_check
      _
    $region7: #{tpu_custom_call.1} parent=1 // pred_check_branch
      %22 = sbr.rel (0) target = $region9
    $region8: #{tpu_custom_call.1} parent=1 // pred_region
      %24 = vsyncadd [#allocation6], 0
      %s25 = sshll.u32 %s1, 4
      %s26 = int_to_ptr.hbm [resolvable:$true] %s25
      %s27 = sshll.u32 [#allocation5], 4
      %s28 = int_to_ptr.vmem [resolvable:$true] %s27
      %33 = dma.hbm_to_vmem [thread:$0]  %s26, 8192, %s28, [#allocation6], 256, 256, 16
    $region9: #{tpu_custom_call.1} parent=1 // pred_fallthru
      _
    // Predicated region
    $region10: #{tpu_custom_call.1} parent=1 // pred_check
      _
    $region11: #{tpu_custom_call.1} parent=1 // pred_check_branch
      %35 = sbr.rel (0) target = $region13
    $region12: #{tpu_custom_call.1} parent=1 // pred_region
      %37 = dma.done [#allocation3], 256
    $region13: #{tpu_custom_call.1} parent=1 // pred_fallthru
      _
    // Predicated region
    $region14: #{tpu_custom_call.1} parent=1 // pred_check
      _
    $region15: #{tpu_custom_call.1} parent=1 // pred_check_branch
      %39 = sbr.rel (0) target = $region17
    $region16: #{tpu_custom_call.1} parent=1 // pred_region
      %41 = dma.done [#allocation6], 8192
    $region17: #{tpu_custom_call.1} parent=1 // pred_fallthru
      _
    %v42 = vld [vmem:[#allocation2] sm:$0xff]
    %v43 = vld [vmem:[#allocation2 + $0x8] sm:$0xff]
    %44 = vst [vmem:[#allocation7] sm:$0xff] %v42
    %45 = vst [vmem:[#allocation7 + $0x8] sm:$0xff] %v43
    %v48 = vrot.slane %v42, 2
    %v49 = vrot.slane %v43, 2
    %v52 = vadd.f32 %v42, %v48
    %v53 = vadd.f32 %v43, %v49
    %v54 = vrot.slane %v42, 4
    %v55 = vrot.slane %v43, 4
    %v58 = vadd.f32 %v52, %v54
    %v59 = vadd.f32 %v53, %v55
    %v60 = vrot.slane %v42, 6
    %v61 = vrot.slane %v43, 6
    %v64 = vadd.f32 %v58, %v60
    %v65 = vadd.f32 %v59, %v61
    %v66 = vmul.f32 %v42, 6.123234e-17
    %v67 = vmul.f32 %v43, 6.123234e-17
    %v70 = vrot.slane %v66, 2
    %v71 = vrot.slane %v67, 2
    %v74 = vadd.f32 %v42, %v70
    %v75 = vadd.f32 %v43, %v71
    %v76 = vmul.f32 %v42, -1.0
    %v77 = vmul.f32 %v43, -1.0
    %v80 = vrot.slane %v76, 4
    %v81 = vrot.slane %v77, 4
    %v84 = vadd.f32 %v74, %v80
    %v85 = vadd.f32 %v75, %v81
    %v86 = vmul.f32 %v42, -1.8369701e-16
    %v87 = vmul.f32 %v43, -1.8369701e-16
    %v90 = vrot.slane %v86, 6
    %v91 = vrot.slane %v87, 6
    %v94 = vadd.f32 %v84, %v90
    %v95 = vadd.f32 %v85, %v91
    %v96 = vrot.slane %v76, 2
    %v97 = vrot.slane %v77, 2
    %v100 = vadd.f32 %v42, %v96
    %v101 = vadd.f32 %v43, %v97
    %v102 = vadd.f32 %v100, %v54
    %v103 = vadd.f32 %v101, %v55
    %v104 = vrot.slane %v76, 6
    %v105 = vrot.slane %v77, 6
    %v108 = vadd.f32 %v102, %v104
    %v109 = vadd.f32 %v103, %v105
    %v110 = vrot.slane %v86, 2
    %v111 = vrot.slane %v87, 2
    %v114 = vadd.f32 %v42, %v110
    %v115 = vadd.f32 %v43, %v111
    %v116 = vadd.f32 %v114, %v80
    %v117 = vadd.f32 %v115, %v81
    %v118 = vmul.f32 %v42, 5.5109107e-16
    %v119 = vmul.f32 %v43, 5.5109107e-16
    %v122 = vrot.slane %v118, 6
    %v123 = vrot.slane %v119, 6
    %v126 = vadd.f32 %v116, %v122
    %v127 = vadd.f32 %v117, %v123
    %v130 = vrot.slane %v94, 6
    %v131 = vrot.slane %v95, 6
    %v136 = vrot.slane %v108, 4
    %v137 = vrot.slane %v109, 4
    %v142 = vrot.slane %v126, 2
    %v143 = vrot.slane %v127, 2
    %vm146 = vcmask 1041408
    %v147 = vsel %vm146, %v64, %v130
    %v148 = vsel %vm146, %v65, %v131
    %vm149 = vcmask 1043456
    %v150 = vsel %vm149, %v147, %v136
    %v151 = vsel %vm149, %v148, %v137
    %vm152 = vcmask 1045504
    %v153 = vsel %vm152, %v150, %v142
    %v154 = vsel %vm152, %v151, %v143
    %v155 = vpack.c.bf16 %v153, %v153
    %v156 = vpack.c.bf16 %v154, %v154
    %v157 = vld [vmem:[#allocation5] sm:$0xff]
    %v158 = vld [vmem:[#allocation5 + $0x8] sm:$0xff]
    %v159 = vld [vmem:[#allocation5 + $0x10] sm:$0xff]
    %v160 = vld [vmem:[#allocation5 + $0x18] sm:$0xff]
    %v161 = vld [vmem:[#allocation5 + $0x20] sm:$0xff]
    %v162 = vld [vmem:[#allocation5 + $0x28] sm:$0xff]
    %v163 = vld [vmem:[#allocation5 + $0x30] sm:$0xff]
    %v164 = vld [vmem:[#allocation5 + $0x38] sm:$0xff]
    %v165 = vld [vmem:[#allocation5 + $0x40] sm:$0xff]
    %v166 = vld [vmem:[#allocation5 + $0x48] sm:$0xff]
    %v167 = vld [vmem:[#allocation5 + $0x50] sm:$0xff]
    %v168 = vld [vmem:[#allocation5 + $0x58] sm:$0xff]
    %v169 = vld [vmem:[#allocation5 + $0x60] sm:$0xff]
    %v170 = vld [vmem:[#allocation5 + $0x68] sm:$0xff]
    %v171 = vld [vmem:[#allocation5 + $0x70] sm:$0xff]
    %v172 = vld [vmem:[#allocation5 + $0x78] sm:$0xff]
    %v173 = vld [vmem:[#allocation5 + $0x80] sm:$0xff]
    %v174 = vld [vmem:[#allocation5 + $0x88] sm:$0xff]
    %v175 = vld [vmem:[#allocation5 + $0x90] sm:$0xff]
    %v176 = vld [vmem:[#allocation5 + $0x98] sm:$0xff]
    %v177 = vld [vmem:[#allocation5 + $0xa0] sm:$0xff]
    %v178 = vld [vmem:[#allocation5 + $0xa8] sm:$0xff]
    %v179 = vld [vmem:[#allocation5 + $0xb0] sm:$0xff]
    %v180 = vld [vmem:[#allocation5 + $0xb8] sm:$0xff]
    %v181 = vld [vmem:[#allocation5 + $0xc0] sm:$0xff]
    %v182 = vld [vmem:[#allocation5 + $0xc8] sm:$0xff]
    %v183 = vld [vmem:[#allocation5 + $0xd0] sm:$0xff]
    %v184 = vld [vmem:[#allocation5 + $0xd8] sm:$0xff]
    %v185 = vld [vmem:[#allocation5 + $0xe0] sm:$0xff]
    %v186 = vld [vmem:[#allocation5 + $0xe8] sm:$0xff]
    %v187 = vld [vmem:[#allocation5 + $0xf0] sm:$0xff]
    %v188 = vld [vmem:[#allocation5 + $0xf8] sm:$0xff]
    %v189 = vld [vmem:[#allocation5 + $0x100] sm:$0xff]
    %v190 = vld [vmem:[#allocation5 + $0x108] sm:$0xff]
    %v191 = vld [vmem:[#allocation5 + $0x110] sm:$0xff]
    %v192 = vld [vmem:[#allocation5 + $0x118] sm:$0xff]
    %v193 = vld [vmem:[#allocation5 + $0x120] sm:$0xff]
    %v194 = vld [vmem:[#allocation5 + $0x128] sm:$0xff]
    %v195 = vld [vmem:[#allocation5 + $0x130] sm:$0xff]
    %v196 = vld [vmem:[#allocation5 + $0x138] sm:$0xff]
    %v197 = vld [vmem:[#allocation5 + $0x140] sm:$0xff]
    %v198 = vld [vmem:[#allocation5 + $0x148] sm:$0xff]
    %v199 = vld [vmem:[#allocation5 + $0x150] sm:$0xff]
    %v200 = vld [vmem:[#allocation5 + $0x158] sm:$0xff]
    %v201 = vld [vmem:[#allocation5 + $0x160] sm:$0xff]
    %v202 = vld [vmem:[#allocation5 + $0x168] sm:$0xff]
    %v203 = vld [vmem:[#allocation5 + $0x170] sm:$0xff]
    %v204 = vld [vmem:[#allocation5 + $0x178] sm:$0xff]
    %v205 = vld [vmem:[#allocation5 + $0x180] sm:$0xff]
    %v206 = vld [vmem:[#allocation5 + $0x188] sm:$0xff]
    %v207 = vld [vmem:[#allocation5 + $0x190] sm:$0xff]
    %v208 = vld [vmem:[#allocation5 + $0x198] sm:$0xff]
    %v209 = vld [vmem:[#allocation5 + $0x1a0] sm:$0xff]
    %v210 = vld [vmem:[#allocation5 + $0x1a8] sm:$0xff]
    %v211 = vld [vmem:[#allocation5 + $0x1b0] sm:$0xff]
    %v212 = vld [vmem:[#allocation5 + $0x1b8] sm:$0xff]
    %v213 = vld [vmem:[#allocation5 + $0x1c0] sm:$0xff]
    %v214 = vld [vmem:[#allocation5 + $0x1c8] sm:$0xff]
    %v215 = vld [vmem:[#allocation5 + $0x1d0] sm:$0xff]
    %v216 = vld [vmem:[#allocation5 + $0x1d8] sm:$0xff]
    %v217 = vld [vmem:[#allocation5 + $0x1e0] sm:$0xff]
    %v218 = vld [vmem:[#allocation5 + $0x1e8] sm:$0xff]
    %v219 = vld [vmem:[#allocation5 + $0x1f0] sm:$0xff]
    %v220 = vld [vmem:[#allocation5 + $0x1f8] sm:$0xff]
    %v285 = vunpack.c.l.b16 %v157
    %v286 = vunpack.c.h.b16 %v157
    %v287 = vunpack.c.l.b16 %v158
    %v288 = vunpack.c.h.b16 %v158
    %v289 = vunpack.c.l.b16 %v159
    %v290 = vunpack.c.h.b16 %v159
    %v291 = vunpack.c.l.b16 %v160
    %v292 = vunpack.c.h.b16 %v160
    %v293 = vunpack.c.l.b16 %v161
    %v294 = vunpack.c.h.b16 %v161
    %v295 = vunpack.c.l.b16 %v162
    %v296 = vunpack.c.h.b16 %v162
    %v297 = vunpack.c.l.b16 %v163
    %v298 = vunpack.c.h.b16 %v163
    %v299 = vunpack.c.l.b16 %v164
    %v300 = vunpack.c.h.b16 %v164
    %v301 = vunpack.c.l.b16 %v165
    %v302 = vunpack.c.h.b16 %v165
    %v303 = vunpack.c.l.b16 %v166
    %v304 = vunpack.c.h.b16 %v166
    %v305 = vunpack.c.l.b16 %v167
    %v306 = vunpack.c.h.b16 %v167
    %v307 = vunpack.c.l.b16 %v168
    %v308 = vunpack.c.h.b16 %v168
    %v309 = vunpack.c.l.b16 %v169
    %v310 = vunpack.c.h.b16 %v169
    %v311 = vunpack.c.l.b16 %v170
    %v312 = vunpack.c.h.b16 %v170
    %v313 = vunpack.c.l.b16 %v171
    %v314 = vunpack.c.h.b16 %v171
    %v315 = vunpack.c.l.b16 %v172
    %v316 = vunpack.c.h.b16 %v172
    %v317 = vunpack.c.l.b16 %v173
    %v318 = vunpack.c.h.b16 %v173
    %v319 = vunpack.c.l.b16 %v174
    %v320 = vunpack.c.h.b16 %v174
    %v321 = vunpack.c.l.b16 %v175
    %v322 = vunpack.c.h.b16 %v175
    %v323 = vunpack.c.l.b16 %v176
    %v324 = vunpack.c.h.b16 %v176
    %v325 = vunpack.c.l.b16 %v177
    %v326 = vunpack.c.h.b16 %v177
    %v327 = vunpack.c.l.b16 %v178
    %v328 = vunpack.c.h.b16 %v178
    %v329 = vunpack.c.l.b16 %v179
    %v330 = vunpack.c.h.b16 %v179
    %v331 = vunpack.c.l.b16 %v180
    %v332 = vunpack.c.h.b16 %v180
    %v333 = vunpack.c.l.b16 %v181
    %v334 = vunpack.c.h.b16 %v181
    %v335 = vunpack.c.l.b16 %v182
    %v336 = vunpack.c.h.b16 %v182
    %v337 = vunpack.c.l.b16 %v183
    %v338 = vunpack.c.h.b16 %v183
    %v339 = vunpack.c.l.b16 %v184
    %v340 = vunpack.c.h.b16 %v184
    %v341 = vunpack.c.l.b16 %v185
    %v342 = vunpack.c.h.b16 %v185
    %v343 = vunpack.c.l.b16 %v186
    %v344 = vunpack.c.h.b16 %v186
    %v345 = vunpack.c.l.b16 %v187
    %v346 = vunpack.c.h.b16 %v187
    %v347 = vunpack.c.l.b16 %v188
    %v348 = vunpack.c.h.b16 %v188
    %v349 = vunpack.c.l.b16 %v189
    %v350 = vunpack.c.h.b16 %v189
    %v351 = vunpack.c.l.b16 %v190
    %v352 = vunpack.c.h.b16 %v190
    %v353 = vunpack.c.l.b16 %v191
    %v354 = vunpack.c.h.b16 %v191
    %v355 = vunpack.c.l.b16 %v192
    %v356 = vunpack.c.h.b16 %v192
    %v357 = vunpack.c.l.b16 %v193
    %v358 = vunpack.c.h.b16 %v193
    %v359 = vunpack.c.l.b16 %v194
    %v360 = vunpack.c.h.b16 %v194
    %v361 = vunpack.c.l.b16 %v195
    %v362 = vunpack.c.h.b16 %v195
    %v363 = vunpack.c.l.b16 %v196
    %v364 = vunpack.c.h.b16 %v196
    %v365 = vunpack.c.l.b16 %v197
    %v366 = vunpack.c.h.b16 %v197
    %v367 = vunpack.c.l.b16 %v198
    %v368 = vunpack.c.h.b16 %v198
    %v369 = vunpack.c.l.b16 %v199
    %v370 = vunpack.c.h.b16 %v199
    %v371 = vunpack.c.l.b16 %v200
    %v372 = vunpack.c.h.b16 %v200
    %v373 = vunpack.c.l.b16 %v201
    %v374 = vunpack.c.h.b16 %v201
    %v375 = vunpack.c.l.b16 %v202
    %v376 = vunpack.c.h.b16 %v202
    %v377 = vunpack.c.l.b16 %v203
    %v378 = vunpack.c.h.b16 %v203
    %v379 = vunpack.c.l.b16 %v204
    %v380 = vunpack.c.h.b16 %v204
    %v381 = vunpack.c.l.b16 %v205
    %v382 = vunpack.c.h.b16 %v205
    %v383 = vunpack.c.l.b16 %v206
    %v384 = vunpack.c.h.b16 %v206
    %v385 = vunpack.c.l.b16 %v207
    %v386 = vunpack.c.h.b16 %v207
    %v387 = vunpack.c.l.b16 %v208
    %v388 = vunpack.c.h.b16 %v208
    %v389 = vunpack.c.l.b16 %v209
    %v390 = vunpack.c.h.b16 %v209
    %v391 = vunpack.c.l.b16 %v210
    %v392 = vunpack.c.h.b16 %v210
    %v393 = vunpack.c.l.b16 %v211
    %v394 = vunpack.c.h.b16 %v211
    %v395 = vunpack.c.l.b16 %v212
    %v396 = vunpack.c.h.b16 %v212
    %v397 = vunpack.c.l.b16 %v213
    %v398 = vunpack.c.h.b16 %v213
    %v399 = vunpack.c.l.b16 %v214
    %v400 = vunpack.c.h.b16 %v214
    %v401 = vunpack.c.l.b16 %v215
    %v402 = vunpack.c.h.b16 %v215
    %v403 = vunpack.c.l.b16 %v216
    %v404 = vunpack.c.h.b16 %v216
    %v405 = vunpack.c.l.b16 %v217
    %v406 = vunpack.c.h.b16 %v217
    %v407 = vunpack.c.l.b16 %v218
    %v408 = vunpack.c.h.b16 %v218
    %v409 = vunpack.c.l.b16 %v219
    %v410 = vunpack.c.h.b16 %v219
    %v411 = vunpack.c.l.b16 %v220
    %v412 = vunpack.c.h.b16 %v220
    %v413 = vpack.c.b16 %v289, %v285
    %v414 = vpack.c.b16 %v290, %v286
    %v415 = vpack.c.b16 %v291, %v287
    %v416 = vpack.c.b16 %v292, %v288
    %v417 = vpack.c.b16 %v297, %v293
    %v418 = vpack.c.b16 %v298, %v294
    %v419 = vpack.c.b16 %v299, %v295
    %v420 = vpack.c.b16 %v300, %v296
    %v421 = vpack.c.b16 %v305, %v301
    %v422 = vpack.c.b16 %v306, %v302
    %v423 = vpack.c.b16 %v307, %v303
    %v424 = vpack.c.b16 %v308, %v304
    %v425 = vpack.c.b16 %v313, %v309
    %v426 = vpack.c.b16 %v314, %v310
    %v427 = vpack.c.b16 %v315, %v311
    %v428 = vpack.c.b16 %v316, %v312
    %v429 = vpack.c.b16 %v321, %v317
    %v430 = vpack.c.b16 %v322, %v318
    %v431 = vpack.c.b16 %v323, %v319
    %v432 = vpack.c.b16 %v324, %v320
    %v433 = vpack.c.b16 %v329, %v325
    %v434 = vpack.c.b16 %v330, %v326
    %v435 = vpack.c.b16 %v331, %v327
    %v436 = vpack.c.b16 %v332, %v328
    %v437 = vpack.c.b16 %v337, %v333
    %v438 = vpack.c.b16 %v338, %v334
    %v439 = vpack.c.b16 %v339, %v335
    %v440 = vpack.c.b16 %v340, %v336
    %v441 = vpack.c.b16 %v345, %v341
    %v442 = vpack.c.b16 %v346, %v342
    %v443 = vpack.c.b16 %v347, %v343
    %v444 = vpack.c.b16 %v348, %v344
    %v445 = vpack.c.b16 %v353, %v349
    %v446 = vpack.c.b16 %v354, %v350
    %v447 = vpack.c.b16 %v355, %v351
    %v448 = vpack.c.b16 %v356, %v352
    %v449 = vpack.c.b16 %v361, %v357
    %v450 = vpack.c.b16 %v362, %v358
    %v451 = vpack.c.b16 %v363, %v359
    %v452 = vpack.c.b16 %v364, %v360
    %v453 = vpack.c.b16 %v369, %v365
    %v454 = vpack.c.b16 %v370, %v366
    %v455 = vpack.c.b16 %v371, %v367
    %v456 = vpack.c.b16 %v372, %v368
    %v457 = vpack.c.b16 %v377, %v373
    %v458 = vpack.c.b16 %v378, %v374
    %v459 = vpack.c.b16 %v379, %v375
    %v460 = vpack.c.b16 %v380, %v376
    %v461 = vpack.c.b16 %v385, %v381
    %v462 = vpack.c.b16 %v386, %v382
    %v463 = vpack.c.b16 %v387, %v383
    %v464 = vpack.c.b16 %v388, %v384
    %v465 = vpack.c.b16 %v393, %v389
    %v466 = vpack.c.b16 %v394, %v390
    %v467 = vpack.c.b16 %v395, %v391
    %v468 = vpack.c.b16 %v396, %v392
    %v469 = vpack.c.b16 %v401, %v397
    %v470 = vpack.c.b16 %v402, %v398
    %v471 = vpack.c.b16 %v403, %v399
    %v472 = vpack.c.b16 %v404, %v400
    %v473 = vpack.c.b16 %v409, %v405
    %v474 = vpack.c.b16 %v410, %v406
    %v475 = vpack.c.b16 %v411, %v407
    %v476 = vpack.c.b16 %v412, %v408
    %541 = vmatpush.bf16.msra.mxu0 %v441
    %542 = vmatpush.bf16.msra.mxu0 %v437
    %543 = vmatpush.bf16.msra.mxu0 %v433
    %544 = vmatpush.bf16.msra.mxu0 %v429
    %545 = vmatpush.bf16.msra.mxu0 %v425
    %546 = vmatpush.bf16.msra.mxu0 %v421
    %547 = vmatpush.bf16.msra.mxu0 %v417
    %548 = vmatpush.bf16.msra.mxu0 %v413
    %549 = vmatmul.bf16.gmra.mxu0 %v155
    %v550 = vpop.f32.mrf.mxu0
    %v551 = vadd.f32 0.0, %v550
    %v552 = vpop.f32.mrf.mxu0
    %553 = vdwg.mxu0
    %554 = vmatpush.bf16.msra.mxu0 %v473
    %555 = vmatpush.bf16.msra.mxu0 %v469
    %556 = vmatpush.bf16.msra.mxu0 %v465
    %557 = vmatpush.bf16.msra.mxu0 %v461
    %558 = vmatpush.bf16.msra.mxu0 %v457
    %559 = vmatpush.bf16.msra.mxu0 %v453
    %560 = vmatpush.bf16.msra.mxu0 %v449
    %561 = vmatpush.bf16.msra.mxu0 %v445
    %562 = vmatmul.bf16.gmra.mxu0 %v156
    %v563 = vpop.f32.mrf.mxu0
    %v564 = vadd.f32 %v551, %v563
    %v565 = vpop.f32.mrf.mxu0
    %566 = vdwg.mxu0
    %567 = vmatpush.bf16.msra.mxu0 %v442
    %568 = vmatpush.bf16.msra.mxu0 %v438
    %569 = vmatpush.bf16.msra.mxu0 %v434
    %570 = vmatpush.bf16.msra.mxu0 %v430
    %571 = vmatpush.bf16.msra.mxu0 %v426
    %572 = vmatpush.bf16.msra.mxu0 %v422
    %573 = vmatpush.bf16.msra.mxu0 %v418
    %574 = vmatpush.bf16.msra.mxu0 %v414
    %575 = vmatmul.bf16.gmra.mxu0 %v155
    %v576 = vpop.f32.mrf.mxu0
    %v577 = vadd.f32 0.0, %v576
    %v578 = vpop.f32.mrf.mxu0
    %579 = vdwg.mxu0
    %580 = vmatpush.bf16.msra.mxu0 %v474
    %581 = vmatpush.bf16.msra.mxu0 %v470
    %582 = vmatpush.bf16.msra.mxu0 %v466
    %583 = vmatpush.bf16.msra.mxu0 %v462
    %584 = vmatpush.bf16.msra.mxu0 %v458
    %585 = vmatpush.bf16.msra.mxu0 %v454
    %586 = vmatpush.bf16.msra.mxu0 %v450
    %587 = vmatpush.bf16.msra.mxu0 %v446
    %588 = vmatmul.bf16.gmra.mxu0 %v156
    %v589 = vpop.f32.mrf.mxu0
    %v590 = vadd.f32 %v577, %v589
    %v591 = vpop.f32.mrf.mxu0
    %592 = vdwg.mxu0
    %593 = vmatpush.bf16.msra.mxu0 %v443
    %594 = vmatpush.bf16.msra.mxu0 %v439
    %595 = vmatpush.bf16.msra.mxu0 %v435
    %596 = vmatpush.bf16.msra.mxu0 %v431
    %597 = vmatpush.bf16.msra.mxu0 %v427
    %598 = vmatpush.bf16.msra.mxu0 %v423
    %599 = vmatpush.bf16.msra.mxu0 %v419
    %600 = vmatpush.bf16.msra.mxu0 %v415
    %601 = vmatmul.bf16.gmra.mxu0 %v155
    %v602 = vpop.f32.mrf.mxu0
    %v603 = vadd.f32 0.0, %v602
    %v604 = vpop.f32.mrf.mxu0
    %605 = vdwg.mxu0
    %606 = vmatpush.bf16.msra.mxu0 %v475
    %607 = vmatpush.bf16.msra.mxu0 %v471
    %608 = vmatpush.bf16.msra.mxu0 %v467
    %609 = vmatpush.bf16.msra.mxu0 %v463
    %610 = vmatpush.bf16.msra.mxu0 %v459
    %611 = vmatpush.bf16.msra.mxu0 %v455
    %612 = vmatpush.bf16.msra.mxu0 %v451
    %613 = vmatpush.bf16.msra.mxu0 %v447
    %614 = vmatmul.bf16.gmra.mxu0 %v156
    %v615 = vpop.f32.mrf.mxu0
    %v616 = vadd.f32 %v603, %v615
    %v617 = vpop.f32.mrf.mxu0
    %618 = vdwg.mxu0
    %619 = vmatpush.bf16.msra.mxu0 %v444
    %620 = vmatpush.bf16.msra.mxu0 %v440
    %621 = vmatpush.bf16.msra.mxu0 %v436
    %622 = vmatpush.bf16.msra.mxu0 %v432
    %623 = vmatpush.bf16.msra.mxu0 %v428
    %624 = vmatpush.bf16.msra.mxu0 %v424
    %625 = vmatpush.bf16.msra.mxu0 %v420
    %626 = vmatpush.bf16.msra.mxu0 %v416
    %627 = vmatmul.bf16.gmra.mxu0 %v155
    %v628 = vpop.f32.mrf.mxu0
    %v629 = vadd.f32 0.0, %v628
    %v630 = vpop.f32.mrf.mxu0
    %631 = vdwg.mxu0
    %632 = vmatpush.bf16.msra.mxu0 %v476
    %633 = vmatpush.bf16.msra.mxu0 %v472
    %634 = vmatpush.bf16.msra.mxu0 %v468
    %635 = vmatpush.bf16.msra.mxu0 %v464
    %636 = vmatpush.bf16.msra.mxu0 %v460
    %637 = vmatpush.bf16.msra.mxu0 %v456
    %638 = vmatpush.bf16.msra.mxu0 %v452
    %639 = vmatpush.bf16.msra.mxu0 %v448
    %640 = vmatmul.bf16.gmra.mxu0 %v156
    %v641 = vpop.f32.mrf.mxu0
    %v642 = vadd.f32 %v629, %v641
    %v643 = vpop.f32.mrf.mxu0
    %644 = vdwg.mxu0
    %s645 = scalar_lea.vmem [#allocation7], 16
    %646 = vst [vmem:[%s645] sm:$0xff] %v564
    %647 = vst [vmem:[%s645 + $0x8] sm:$0xff] %v590
    %s648 = scalar_lea.vmem [#allocation7], 32
    %649 = vst [vmem:[%s648] sm:$0xff] %v616
    %650 = vst [vmem:[%s648 + $0x8] sm:$0xff] %v642
    // Predicated region
    $region18: #{tpu_custom_call.1} parent=1 // pred_check
      _
    $region19: #{tpu_custom_call.1} parent=1 // pred_check_branch
      %652 = sbr.rel (0) target = $region21
    $region20: #{tpu_custom_call.1} parent=1 // pred_region
      %654 = vsyncadd [#allocation4], 0
      %s655 = sshll.u32 [#allocation7], 4
      %s656 = int_to_ptr.vmem [resolvable:$true] %s655
      %s657 = sshll.u32 %s2, 4
      %s658 = int_to_ptr.hbm [resolvable:$true] %s657
      %663 = dma.vmem_to_hbm [thread:$0]  %s656, 768, %s658, [#allocation4], 256, 256, 16
    $region21: #{tpu_custom_call.1} parent=1 // pred_fallthru
      _
    // Predicated region
    $region22: #{tpu_custom_call.1} parent=1 // pred_check
      _
    $region23: #{tpu_custom_call.1} parent=1 // pred_check_branch
      %665 = sbr.rel (0) target = $region25
    $region24: #{tpu_custom_call.1} parent=1 // pred_region
      %667 = dma.done [#allocation4], 768
    $region25: #{tpu_custom_call.1} parent=1 // pred_fallthru
      _
    %668 = vsyncpa [#allocation3], 1
    %669 = vsyncpa [#allocation6], 1
    %670 = vsyncpa [#allocation4], 1

</llo_original>
